<compile_context>
chip_gen: v7x
topology: tpu7x:2x2x1
jax: 0.10.0
libtpu: 0.0.40
codegen_flags: <defaults>
</compile_context>

<pallas_src>
import jax
import jax.numpy as jnp
from jax.experimental import pallas as pl
from jax.experimental.pallas import tpu as pltpu


# ----------------------------- Pallas kernel --------------------------------

def _transition_kernel(x_ref, scale_ref, shift_ref, w_ref, o_ref):
    """Fused BN(eval) + ReLU + 2x2 AvgPool + 1x1 Conv on RP image-row pairs.

    x_ref:     (RP, 2, Wo, 2*Cin) bfloat16 -- RP row pairs; the lane dim packs the
                                              two image columns of each pooling
                                              window as [even-col Cin | odd-col Cin]
    scale_ref: (1, 2*Cin)         float32  -- gamma / sqrt(var + eps), tiled x2
    shift_ref: (1, 2*Cin)         float32  -- beta - mean * scale, tiled x2
    w_ref:     (Cin, Cout)        bfloat16 -- 1x1 conv weight, pre-transposed
    o_ref:     (RP, Wo, Cout)     float32 (or bf16)
    """
    rp, _, wo, cin2 = x_ref.shape
    cin = cin2 // 2
    cout = o_ref.shape[-1]

    # Single full-tile load, upcast to f32, BN affine + ReLU once on the VPU.
    x = x_ref[...].astype(jnp.float32)
    z = jnp.maximum(x * scale_ref[...] + shift_ref[...], 0.0)   # (RP, 2, Wo, 2*Cin)

    # 2x2 average pool: columns via 128-aligned lane slices (no strided access),
    # rows via the leading parity dim.  Pooling commutes with the 1x1 conv.
    zc = z[..., :cin] + z[..., cin:]                            # (RP, 2, Wo, Cin)
    zp = (zc[:, 0] + zc[:, 1]) * 0.25                           # (RP, Wo, Cin)

    # 1x1 conv == channel matmul: bf16 operands, f32 accumulation on the MXU.
    a = zp.reshape(rp * wo, cin).astype(jnp.bfloat16)
    y = jnp.dot(a, w_ref[...], preferred_element_type=jnp.float32)
    o_ref[...] = y.reshape(rp, wo, cout).astype(o_ref.dtype)


# --------------------------- tiling heuristics -------------------------------

def _vmem_block_budget():
    """Per input-block byte budget, generation aware (v7x has only 64 MiB VMEM)."""
    cap = 64 << 20
    try:
        cap = int(getattr(pltpu.get_tpu_info(), "vmem_capacity_bytes", cap))
    except Exception:       # conservative default if the query is unavailable
        pass
    return (8 << 20) if cap >= (100 << 20) else (4 << 20)


def _pick_row_pairs(m_pairs, wo, bytes_per_pair, budget, min_m_per_block=256):
    """Row pairs per grid step.

    Biggest block under the VMEM budget -> fewest ~0.35us grid steps (this layer
    is latency/memory bound, not compute bound).  A single grid step is allowed
    (1-TC v5e/v6e); we only split into >=2 steps when each step still fills a
    256-wide MXU pass in M (rp*Wo >= 256), so the split helps v7x's two
    TensorCores instead of being pure serial overhead.
    """
    rp = max(1, min(int(budget // bytes_per_pair), m_pairs))
    if rp == m_pairs and m_pairs > 1:
        half = (m_pairs + 1) // 2
        if half * wo >= min_m_per_block:
            rp = half
    return rp


# ------------------------------ wrapper glue ---------------------------------

def transition_forward_nhwc(params, x_nhwc, *, out_dtype=jnp.float32):
    """Pallas forward for Transition (eval mode).  NHWC in -> NHWC out.

    Set out_dtype=jnp.bfloat16 if the consumer accepts bf16 (halves writeback).
    """
    scale2, shift2, w_io = params["scale2"], params["shift2"], params["w_io"]
    n, h, w, cin = x_nhwc.shape
    cout = w_io.shape[1]
    # TODO(synk): PyTorch AvgPool2d(2) floors odd spatial sizes; this fused kernel
    # assumes even H, W.
    assert h % 2 == 0 and w % 2 == 0, "fused AvgPool2d(2) assumes even H, W"
    wo = w // 2
    m_pairs = (n * h) // 2

    # bf16 at the HBM boundary + metadata-only reshape: each pooling window's two
    # columns land side by side in the lane dim ([even-col Cin | odd-col Cin]),
    # and adjacent image rows form pairs (never crossing image boundaries).
    xg = x_nhwc.astype(jnp.bfloat16).reshape(m_pairs, 2, wo, 2 * cin)

    bytes_per_pair = 2 * wo * 2 * cin * 2            # bf16 bytes per row pair
    rp = _pick_row_pairs(m_pairs, wo, bytes_per_pair, _vmem_block_budget())
    grid_n = pl.cdiv(m_pairs, rp)
    padded = grid_n * rp
    if padded != m_pairs:                            # awkward N*H/2: pad, don't shrink rp
        xg = jnp.pad(xg, ((0, padded - m_pairs), (0, 0), (0, 0), (0, 0)))

    out = pl.pallas_call(
        _transition_kernel,
        out_shape=jax.ShapeDtypeStruct((padded, wo, cout), out_dtype),
        grid_spec=pltpu.PrefetchScalarGridSpec(
            num_scalar_prefetch=0,
            grid=(grid_n,),
            in_specs=[
                pl.BlockSpec((rp, 2, wo, 2 * cin), lambda i: (i, 0, 0, 0)),
                pl.BlockSpec((1, 2 * cin), lambda i: (0, 0)),    # scale (resident)
                pl.BlockSpec((1, 2 * cin), lambda i: (0, 0)),    # shift (resident)
                pl.BlockSpec((cin, cout), lambda i: (0, 0)),     # weight (resident)
            ],
            out_specs=pl.BlockSpec((rp, wo, cout), lambda i: (i, 0, 0)),
        ),
        compiler_params=pltpu.CompilerParams(
            dimension_semantics=("parallel",),       # v7x megacore shards the grid
            vmem_limit_bytes=64 << 20,               # v5e default scope is only 16 MiB
        ),
    )(xg, scale2, shift2, w_io)

    if padded != m_pairs:
        out = out[:m_pairs]
    return out.reshape(n, h // 2, wo, cout)


def transition_forward(params, x_nchw, *, out_dtype=jnp.float32):
    """NCHW wrapper for PyTorch parity.  The two transposes are full HBM round
    trips around the kernel; a DenseNet stack kept in NHWC should call
    transition_forward_nhwc directly and skip them."""
    y = transition_forward_nhwc(params, jnp.transpose(x_nchw, (0, 2, 3, 1)),
                                out_dtype=out_dtype)
    return jnp.transpose(y, (0, 3, 1, 2))


# ----------------------------- parameter init --------------------------------

def init_params(key, in_channels, out_channels):
    """PyTorch-style init; fold BN stats and pre-transpose the conv weight once."""
    k_w, k_g, k_b, k_m, k_v = jax.random.split(key, 5)

    # Conv2d(in, out, kernel_size=1, bias=False): kaiming-ish normal, OIHW.
    std = (2.0 / in_channels) ** 0.5
    w_oihw = jax.random.normal(
        k_w, (out_channels, in_channels, 1, 1), jnp.float32) * std

    # BatchNorm2d affine params + running stats (randomised; eval-mode fold).
    gamma = jax.random.uniform(k_g, (in_channels,), jnp.float32, 0.5, 1.5)
    beta = jax.random.normal(k_b, (in_channels,), jnp.float32) * 0.1
    mean = jax.random.normal(k_m, (in_channels,), jnp.float32) * 0.1
    var = jax.random.uniform(k_v, (in_channels,), jnp.float32, 0.5, 1.5)
    eps = 1e-5
    scale = gamma / jnp.sqrt(var + eps)
    shift = beta - mean * scale

    # (Cout, Cin, 1, 1) -> (Cin, Cout), cast once to bf16 for the MXU.
    w_io_f32 = jnp.transpose(w_oihw[:, :, 0, 0], (1, 0))
    params = {
        # scale/shift tiled x2 to match the [even-col Cin | odd-col Cin] lane layout.
        "scale2": jnp.tile(scale, 2).reshape(1, 2 * in_channels),
        "shift2": jnp.tile(shift, 2).reshape(1, 2 * in_channels),
        "w_io": w_io_f32.astype(jnp.bfloat16),
    }
    ref_params = {"scale": scale, "shift": shift, "w_io_f32": w_io_f32}
    return params, ref_params


# -------------------------- pure-JAX reference -------------------------------

def transition_reference(ref_params, x_nchw):
    scale = ref_params["scale"]
    shift = ref_params["shift"]
    w_io = ref_params["w_io_f32"]
    x = jnp.transpose(x_nchw, (0, 2, 3, 1)).astype(jnp.float32)
    z = jnp.maximum(x * scale + shift, 0.0)
    y = jnp.einsum("nhwc,co->nhwo", z, w_io)
    n, h, w, co = y.shape
    y = y.reshape(n, h // 2, 2, w // 2, 2, co).mean(axis=(2, 4))
    return jnp.transpose(y, (0, 3, 1, 2))


# ---------------------------------- main --------------------------------------

if __name__ == "__main__":
    key = jax.random.PRNGKey(0)
    k_p, k_x = jax.random.split(key)

    # DenseNet-style transition: 256 -> 128 channels, small spatial grid.
    in_channels, out_channels = 256, 128
    params, ref_params = init_params(k_p, in_channels, out_channels)

    # PyTorch-style NCHW input.
    x = jax.random.normal(k_x, (2, in_channels, 16, 16), jnp.float32)

    fwd = jax.jit(transition_forward)
    out = jax.block_until_ready(fwd(params, x))
    assert out.shape == (2, out_channels, 8, 8), out.shape
    assert bool(jnp.all(jnp.isfinite(out)))

    # Numerical check: the reference sees the same bf16-rounded activations the
    # kernel reads from HBM, so the tolerance only covers the bf16 MXU operands.
    x_q = x.astype(jnp.bfloat16).astype(jnp.float32)
    ref = transition_reference(ref_params, x_q)
    rel_err = float(jnp.max(jnp.abs(out - ref)) / (jnp.max(jnp.abs(ref)) + 1e-6))
    assert rel_err < 2e-2, f"relative error too high: {rel_err}"

    print("KERNEL_OK")
</pallas_src>

<mosaic_0001>
module attributes {stable_mosaic.version = 11 : i64} {
  func.func @_transition_kernel(%arg0: i32, %arg1: memref<16x2x8x512xbf16, #tpu.memory_space<vmem>>, %arg2: memref<1x512xf32, #tpu.memory_space<vmem>>, %arg3: memref<1x512xf32, #tpu.memory_space<vmem>>, %arg4: memref<256x128xbf16, #tpu.memory_space<vmem>>, %arg5: memref<16x8x128xf32, #tpu.memory_space<vmem>>) attributes {dimension_semantics = [#tpu.dimension_semantics<parallel>], iteration_bounds = array<i64: 1>, scalar_prefetch = 0 : i64, scratch_operands = 0 : i64, tpu.core_type = #tpu.core_type<tc>, window_params = [{transform_indices = @transform_0, window_bounds = array<i64: 16, 2, 8, 512>}, {pipeline_mode = #tpu.pipeline_mode<synchronous>, transform_indices = @transform_1, window_bounds = array<i64: 1, 512>}, {pipeline_mode = #tpu.pipeline_mode<synchronous>, transform_indices = @transform_2, window_bounds = array<i64: 1, 512>}, {pipeline_mode = #tpu.pipeline_mode<synchronous>, transform_indices = @transform_3, window_bounds = array<i64: 256, 128>}, {transform_indices = @transform_4, window_bounds = array<i64: 16, 8, 128>}]} {
    %c0 = arith.constant 0 : index
    %c0_0 = arith.constant 0 : index
    %c0_1 = arith.constant 0 : index
    %c0_2 = arith.constant 0 : index
    %0 = vector.load %arg1[%c0, %c0_0, %c0_1, %c0_2] : memref<16x2x8x512xbf16, #tpu.memory_space<vmem>>, vector<16x2x8x512xbf16>
    %1 = arith.extf %0 : vector<16x2x8x512xbf16> to vector<16x2x8x512xf32>
    %c0_3 = arith.constant 0 : index
    %c0_4 = arith.constant 0 : index
    %2 = vector.load %arg2[%c0_3, %c0_4] : memref<1x512xf32, #tpu.memory_space<vmem>>, vector<1x512xf32>
    %3 = vector.shape_cast %2 : vector<1x512xf32> to vector<1x1x1x512xf32>
    %4 = vector.broadcast %3 : vector<1x1x1x512xf32> to vector<16x2x8x512xf32>
    %5 = arith.mulf %1, %4 : vector<16x2x8x512xf32>
    %c0_5 = arith.constant 0 : index
    %c0_6 = arith.constant 0 : index
    %6 = vector.load %arg3[%c0_5, %c0_6] : memref<1x512xf32, #tpu.memory_space<vmem>>, vector<1x512xf32>
    %7 = vector.shape_cast %6 : vector<1x512xf32> to vector<1x1x1x512xf32>
    %8 = vector.broadcast %7 : vector<1x1x1x512xf32> to vector<16x2x8x512xf32>
    %9 = arith.addf %5, %8 : vector<16x2x8x512xf32>
    %cst = arith.constant 0.000000e+00 : f32
    %10 = vector.broadcast %cst : f32 to vector<16x2x8x512xf32>
    %11 = arith.maximumf %9, %10 : vector<16x2x8x512xf32>
    %12 = vector.extract_strided_slice %11 {offsets = [0, 0, 0, 0], sizes = [16, 2, 8, 256], strides = [1, 1, 1, 1]} : vector<16x2x8x512xf32> to vector<16x2x8x256xf32>
    %13 = vector.extract_strided_slice %11 {offsets = [0, 0, 0, 256], sizes = [16, 2, 8, 256], strides = [1, 1, 1, 1]} : vector<16x2x8x512xf32> to vector<16x2x8x256xf32>
    %14 = arith.addf %12, %13 : vector<16x2x8x256xf32>
    %15 = vector.extract_strided_slice %14 {offsets = [0, 0, 0, 0], sizes = [16, 1, 8, 256], strides = [1, 1, 1, 1]} : vector<16x2x8x256xf32> to vector<16x1x8x256xf32>
    %16 = vector.shape_cast %15 : vector<16x1x8x256xf32> to vector<16x8x256xf32>
    %17 = vector.extract_strided_slice %14 {offsets = [0, 1, 0, 0], sizes = [16, 1, 8, 256], strides = [1, 1, 1, 1]} : vector<16x2x8x256xf32> to vector<16x1x8x256xf32>
    %18 = vector.shape_cast %17 : vector<16x1x8x256xf32> to vector<16x8x256xf32>
    %19 = arith.addf %16, %18 : vector<16x8x256xf32>
    %cst_7 = arith.constant 2.500000e-01 : f32
    %20 = vector.broadcast %cst_7 : f32 to vector<16x8x256xf32>
    %21 = arith.mulf %19, %20 : vector<16x8x256xf32>
    %22 = vector.shape_cast %21 : vector<16x8x256xf32> to vector<128x256xf32>
    %23 = arith.truncf %22 : vector<128x256xf32> to vector<128x256xbf16>
    %c0_8 = arith.constant 0 : index
    %c0_9 = arith.constant 0 : index
    %24 = vector.load %arg4[%c0_8, %c0_9] : memref<256x128xbf16, #tpu.memory_space<vmem>>, vector<256x128xbf16>
    %cst_10 = arith.constant dense<0.000000e+00> : vector<128x128xf32>
    %25 = tpu.matmul %23, %24, %cst_10 {dimension_numbers = #tpu.dot_dimension_numbers<[1], [0], [0], [1], [0, 0, 1, 1], [], []>} : vector<128x256xbf16>, vector<256x128xbf16>, vector<128x128xf32> -> vector<128x128xf32>
    %26 = vector.shape_cast %25 : vector<128x128xf32> to vector<16x8x128xf32>
    %c0_11 = arith.constant 0 : index
    %c0_12 = arith.constant 0 : index
    %c0_13 = arith.constant 0 : index
    %27 = vector.load %arg5[%c0_11, %c0_12, %c0_13] : memref<16x8x128xf32, #tpu.memory_space<vmem>>, vector<16x8x128xf32>
    tpu.vector_store %arg5[%c0_11, %c0_12, %c0_13], %26 {strides = array<i32>} : memref<16x8x128xf32, #tpu.memory_space<vmem>>, vector<16x8x128xf32>,
    return
  }
  func.func @transform_0(%arg0: i32) -> (i32, i32, i32, i32) {
    %c0_i32 = arith.constant 0 : i32
    %c0_i32_0 = arith.constant 0 : i32
    %c0_i32_1 = arith.constant 0 : i32
    %c0_i32_2 = arith.constant 0 : i32
    return %arg0, %c0_i32, %c0_i32_0, %c0_i32_1 : i32, i32, i32, i32
  }
  func.func @transform_1(%arg0: i32) -> (i32, i32) {
    %c0_i32 = arith.constant 0 : i32
    %c0_i32_0 = arith.constant 0 : i32
    %c0_i32_1 = arith.constant 0 : i32
    return %c0_i32, %c0_i32_0 : i32, i32
  }
  func.func @transform_2(%arg0: i32) -> (i32, i32) {
    %c0_i32 = arith.constant 0 : i32
    %c0_i32_0 = arith.constant 0 : i32
    %c0_i32_1 = arith.constant 0 : i32
    return %c0_i32, %c0_i32_0 : i32, i32
  }
  func.func @transform_3(%arg0: i32) -> (i32, i32) {
    %c0_i32 = arith.constant 0 : i32
    %c0_i32_0 = arith.constant 0 : i32
    %c0_i32_1 = arith.constant 0 : i32
    return %c0_i32, %c0_i32_0 : i32, i32
  }
  func.func @transform_4(%arg0: i32) -> (i32, i32, i32) {
    %c0_i32 = arith.constant 0 : i32
    %c0_i32_0 = arith.constant 0 : i32
    %c0_i32_1 = arith.constant 0 : i32
    return %arg0, %c0_i32, %c0_i32_0 : i32, i32, i32
  }
}

</mosaic_0001>

<llo_original>
// kernel: transition_forward.1
$region0: #{transition_forward.1}
  #allocation0 [shape = 'u32[]', space=smem, size = 0x4, offset = 0x4, fixed_abs, tag = 'smem constant byte address 0x4 - core index']
  #allocation1 [shape = 'u32[144,128]{1,0:T(1,128)}', space=vmem, size = 0x12000, scoped, tag = 'internal scratch']
  %s0 = inlined_call_operand.hbm [shape: bf16[16,2,8,512], index: 0, kind: input, shape index: {}]
  %s1 = inlined_call_operand.hbm [shape: f32[1,512], index: 1, kind: input, shape index: {}]
  %s2 = inlined_call_operand.hbm [shape: f32[1,512], index: 2, kind: input, shape index: {}]
  %s3 = inlined_call_operand.hbm [shape: bf16[256,128], index: 3, kind: input, shape index: {}]
  %s4 = inlined_call_operand.hbm [shape: f32[16,8,128], index: 4, kind: output, shape index: {}]
  %s5 = sld [smem:[#allocation0]]
  $region42: #{transition_forward.1} parent=0
    _
  %s7 = ssub.s32 1, %s5
  %s8 = scalar_select 0, %s7, %s5
  $region1: #{transition_forward.1} parent=0
    #allocation2 [shape = 'u8[262144]{0}', space=vmem, size = 0x40000, scoped, tag = 'input window, operand 0, single buffered']
    #allocation3 [shape = 's32[1]{0}', space=sflag, size = 0x4, scoped, tag = 'scoped memory for transition_forward.1']
    #allocation4 [shape = 's32[1]{0}', space=sflag, size = 0x4, scoped, tag = 'scoped memory for transition_forward.1']
    #allocation5 [shape = 'u8[2048]{0}', space=vmem, size = 0x800, scoped, tag = 'input window, operand 1, single buffered']
    #allocation6 [shape = 's32[1]{0}', space=sflag, size = 0x4, scoped, tag = 'scoped memory for transition_forward.1']
    #allocation7 [shape = 'u8[2048]{0}', space=vmem, size = 0x800, scoped, tag = 'input window, operand 2, single buffered']
    #allocation8 [shape = 'u8[65536]{0}', space=vmem, size = 0x10000, scoped, tag = 'input window, operand 3, single buffered']
    #allocation9 [shape = 's32[1]{0}', space=sflag, size = 0x4, scoped, tag = 'scoped memory for transition_forward.1']
    #allocation10 [shape = 'u8[65536]{0}', space=vmem, size = 0x10000, scoped, tag = 'output window, operand 0, single buffered']
    %9 = vsyncpa [#allocation3], 0
    %10 = vsyncpa [#allocation6], 0
    %11 = vsyncpa [#allocation9], 0
    %12 = vsyncpa [#allocation4], 0
    // Predicated region
    $region2: #{transition_forward.1} parent=1 // pred_check
      _
    $region3: #{transition_forward.1} parent=1 // pred_check_branch
      %14 = sbr.rel (0) target = $region5
    $region4: #{transition_forward.1} parent=1 // pred_region
      %s16 = ssub.s32 8192, 8192
      %17 = vsyncadd [#allocation3], %s16
      %s18 = sshll.u32 [#allocation2], 4
      %s19 = int_to_ptr.vmem [resolvable:$true] %s18
      %24 = dma.hbm_to_vmem [thread:$0]  %s0, 8192, %s19, [#allocation3], 256, 256, 16
    $region5: #{transition_forward.1} parent=1 // pred_fallthru
      _
    // Predicated region
    $region6: #{transition_forward.1} parent=1 // pred_check
      _
    $region7: #{transition_forward.1} parent=1 // pred_check_branch
      %26 = sbr.rel (0) target = $region9
    $region8: #{transition_forward.1} parent=1 // pred_region
      %s28 = ssub.s32 64, 64
      %29 = vsyncadd [#allocation6], %s28
      %s31 = sshll.u32 [#allocation5], 4
      %s32 = int_to_ptr.vmem [resolvable:$true] %s31
      %34 = dma.hbm_to_vmem [thread:$0]  %s1, 64, %s32, [#allocation6]
    $region9: #{transition_forward.1} parent=1 // pred_fallthru
      _
    // Predicated region
    $region10: #{transition_forward.1} parent=1 // pred_check
      _
    $region11: #{transition_forward.1} parent=1 // pred_check_branch
      %36 = sbr.rel (0) target = $region13
    $region12: #{transition_forward.1} parent=1 // pred_region
      %s38 = ssub.s32 64, 64
      %39 = vsyncadd [#allocation6], %s38
      %s41 = sshll.u32 [#allocation7], 4
      %s42 = int_to_ptr.vmem [resolvable:$true] %s41
      %44 = dma.hbm_to_vmem [thread:$0]  %s2, 64, %s42, [#allocation6]
    $region13: #{transition_forward.1} parent=1 // pred_fallthru
      _
    // Predicated region
    $region14: #{transition_forward.1} parent=1 // pred_check
      _
    $region15: #{transition_forward.1} parent=1 // pred_check_branch
      %46 = sbr.rel (0) target = $region17
    $region16: #{transition_forward.1} parent=1 // pred_region
      %s48 = ssub.s32 2048, 2048
      %49 = vsyncadd [#allocation9], %s48
      %s50 = sshll.u32 [#allocation8], 4
      %s51 = int_to_ptr.vmem [resolvable:$true] %s50
      %56 = dma.hbm_to_vmem [thread:$0]  %s3, 2048, %s51, [#allocation9], 64, 64, 4
    $region17: #{transition_forward.1} parent=1 // pred_fallthru
      _
    // Predicated region
    $region18: #{transition_forward.1} parent=1 // pred_check
      _
    $region19: #{transition_forward.1} parent=1 // pred_check_branch
      %58 = sbr.rel (0) target = $region21
    $region20: #{transition_forward.1} parent=1 // pred_region
      %59 = dma.done [#allocation3], 8192
    $region21: #{transition_forward.1} parent=1 // pred_fallthru
      _
    // Predicated region
    $region22: #{transition_forward.1} parent=1 // pred_check
      _
    $region23: #{transition_forward.1} parent=1 // pred_check_branch
      %61 = sbr.rel (0) target = $region25
    $region24: #{transition_forward.1} parent=1 // pred_region
      %62 = dma.done [#allocation6], 64
    $region25: #{transition_forward.1} parent=1 // pred_fallthru
      _
    // Predicated region
    $region26: #{transition_forward.1} parent=1 // pred_check
      _
    $region27: #{transition_forward.1} parent=1 // pred_check_branch
      %64 = sbr.rel (0) target = $region29
    $region28: #{transition_forward.1} parent=1 // pred_region
      %65 = dma.done [#allocation6], 64
    $region29: #{transition_forward.1} parent=1 // pred_fallthru
      _
    // Predicated region
    $region30: #{transition_forward.1} parent=1 // pred_check
      _
    $region31: #{transition_forward.1} parent=1 // pred_check_branch
      %67 = sbr.rel (0) target = $region33
    $region32: #{transition_forward.1} parent=1 // pred_region
      %68 = dma.done [#allocation9], 2048
    $region33: #{transition_forward.1} parent=1 // pred_fallthru
      _
    %v70 = vld [vmem:[#allocation2] sm:$0xff]
    %v71 = vld [vmem:[#allocation2 + $0x8] sm:$0xff]
    %v72 = vld [vmem:[#allocation2 + $0x10] sm:$0xff]
    %v73 = vld [vmem:[#allocation2 + $0x18] sm:$0xff]
    %v74 = vld [vmem:[#allocation2 + $0x20] sm:$0xff]
    %v75 = vld [vmem:[#allocation2 + $0x28] sm:$0xff]
    %v76 = vld [vmem:[#allocation2 + $0x30] sm:$0xff]
    %v77 = vld [vmem:[#allocation2 + $0x38] sm:$0xff]
    %v78 = vld [vmem:[#allocation2 + $0x40] sm:$0xff]
    %v79 = vld [vmem:[#allocation2 + $0x48] sm:$0xff]
    %v80 = vld [vmem:[#allocation2 + $0x50] sm:$0xff]
    %v81 = vld [vmem:[#allocation2 + $0x58] sm:$0xff]
    %v82 = vld [vmem:[#allocation2 + $0x60] sm:$0xff]
    %v83 = vld [vmem:[#allocation2 + $0x68] sm:$0xff]
    %v84 = vld [vmem:[#allocation2 + $0x70] sm:$0xff]
    %v85 = vld [vmem:[#allocation2 + $0x78] sm:$0xff]
    %v86 = vld [vmem:[#allocation2 + $0x80] sm:$0xff]
    %v87 = vld [vmem:[#allocation2 + $0x88] sm:$0xff]
    %v88 = vld [vmem:[#allocation2 + $0x90] sm:$0xff]
    %v89 = vld [vmem:[#allocation2 + $0x98] sm:$0xff]
    %v90 = vld [vmem:[#allocation2 + $0xa0] sm:$0xff]
    %v91 = vld [vmem:[#allocation2 + $0xa8] sm:$0xff]
    %v92 = vld [vmem:[#allocation2 + $0xb0] sm:$0xff]
    %v93 = vld [vmem:[#allocation2 + $0xb8] sm:$0xff]
    %v94 = vld [vmem:[#allocation2 + $0xc0] sm:$0xff]
    %v95 = vld [vmem:[#allocation2 + $0xc8] sm:$0xff]
    %v96 = vld [vmem:[#allocation2 + $0xd0] sm:$0xff]
    %v97 = vld [vmem:[#allocation2 + $0xd8] sm:$0xff]
    %v98 = vld [vmem:[#allocation2 + $0xe0] sm:$0xff]
    %v99 = vld [vmem:[#allocation2 + $0xe8] sm:$0xff]
    %v100 = vld [vmem:[#allocation2 + $0xf0] sm:$0xff]
    %v101 = vld [vmem:[#allocation2 + $0xf8] sm:$0xff]
    %v102 = vld [vmem:[#allocation2 + $0x100] sm:$0xff]
    %v103 = vld [vmem:[#allocation2 + $0x108] sm:$0xff]
    %v104 = vld [vmem:[#allocation2 + $0x110] sm:$0xff]
    %v105 = vld [vmem:[#allocation2 + $0x118] sm:$0xff]
    %v106 = vld [vmem:[#allocation2 + $0x120] sm:$0xff]
    %v107 = vld [vmem:[#allocation2 + $0x128] sm:$0xff]
    %v108 = vld [vmem:[#allocation2 + $0x130] sm:$0xff]
    %v109 = vld [vmem:[#allocation2 + $0x138] sm:$0xff]
    %v110 = vld [vmem:[#allocation2 + $0x140] sm:$0xff]
    %v111 = vld [vmem:[#allocation2 + $0x148] sm:$0xff]
    %v112 = vld [vmem:[#allocation2 + $0x150] sm:$0xff]
    %v113 = vld [vmem:[#allocation2 + $0x158] sm:$0xff]
    %v114 = vld [vmem:[#allocation2 + $0x160] sm:$0xff]
    %v115 = vld [vmem:[#allocation2 + $0x168] sm:$0xff]
    %v116 = vld [vmem:[#allocation2 + $0x170] sm:$0xff]
    %v117 = vld [vmem:[#allocation2 + $0x178] sm:$0xff]
    %v118 = vld [vmem:[#allocation2 + $0x180] sm:$0xff]
    %v119 = vld [vmem:[#allocation2 + $0x188] sm:$0xff]
    %v120 = vld [vmem:[#allocation2 + $0x190] sm:$0xff]
    %v121 = vld [vmem:[#allocation2 + $0x198] sm:$0xff]
    %v122 = vld [vmem:[#allocation2 + $0x1a0] sm:$0xff]
    %v123 = vld [vmem:[#allocation2 + $0x1a8] sm:$0xff]
    %v124 = vld [vmem:[#allocation2 + $0x1b0] sm:$0xff]
    %v125 = vld [vmem:[#allocation2 + $0x1b8] sm:$0xff]
    %v126 = vld [vmem:[#allocation2 + $0x1c0] sm:$0xff]
    %v127 = vld [vmem:[#allocation2 + $0x1c8] sm:$0xff]
    %v128 = vld [vmem:[#allocation2 + $0x1d0] sm:$0xff]
    %v129 = vld [vmem:[#allocation2 + $0x1d8] sm:$0xff]
    %v130 = vld [vmem:[#allocation2 + $0x1e0] sm:$0xff]
    %v131 = vld [vmem:[#allocation2 + $0x1e8] sm:$0xff]
    %v132 = vld [vmem:[#allocation2 + $0x1f0] sm:$0xff]
    %v133 = vld [vmem:[#allocation2 + $0x1f8] sm:$0xff]
    %v134 = vunpack.c.l.bf16 %v70
    %v135 = vunpack.c.h.bf16 %v70
    %v136 = vunpack.c.l.bf16 %v71
    %v137 = vunpack.c.h.bf16 %v71
    %v138 = vunpack.c.l.bf16 %v72
    %v139 = vunpack.c.h.bf16 %v72
    %v140 = vunpack.c.l.bf16 %v73
    %v141 = vunpack.c.h.bf16 %v73
    %v142 = vunpack.c.l.bf16 %v74
    %v143 = vunpack.c.h.bf16 %v74
    %v144 = vunpack.c.l.bf16 %v75
    %v145 = vunpack.c.h.bf16 %v75
    %v146 = vunpack.c.l.bf16 %v76
    %v147 = vunpack.c.h.bf16 %v76
    %v148 = vunpack.c.l.bf16 %v77
    %v149 = vunpack.c.h.bf16 %v77
    %v150 = vunpack.c.l.bf16 %v78
    %v151 = vunpack.c.h.bf16 %v78
    %v152 = vunpack.c.l.bf16 %v79
    %v153 = vunpack.c.h.bf16 %v79
    %v154 = vunpack.c.l.bf16 %v80
    %v155 = vunpack.c.h.bf16 %v80
    %v156 = vunpack.c.l.bf16 %v81
    %v157 = vunpack.c.h.bf16 %v81
    %v158 = vunpack.c.l.bf16 %v82
    %v159 = vunpack.c.h.bf16 %v82
    %v160 = vunpack.c.l.bf16 %v83
    %v161 = vunpack.c.h.bf16 %v83
    %v162 = vunpack.c.l.bf16 %v84
    %v163 = vunpack.c.h.bf16 %v84
    %v164 = vunpack.c.l.bf16 %v85
    %v165 = vunpack.c.h.bf16 %v85
    %v166 = vunpack.c.l.bf16 %v86
    %v167 = vunpack.c.h.bf16 %v86
    %v168 = vunpack.c.l.bf16 %v87
    %v169 = vunpack.c.h.bf16 %v87
    %v170 = vunpack.c.l.bf16 %v88
    %v171 = vunpack.c.h.bf16 %v88
    %v172 = vunpack.c.l.bf16 %v89
    %v173 = vunpack.c.h.bf16 %v89
    %v174 = vunpack.c.l.bf16 %v90
    %v175 = vunpack.c.h.bf16 %v90
    %v176 = vunpack.c.l.bf16 %v91
    %v177 = vunpack.c.h.bf16 %v91
    %v178 = vunpack.c.l.bf16 %v92
    %v179 = vunpack.c.h.bf16 %v92
    %v180 = vunpack.c.l.bf16 %v93
    %v181 = vunpack.c.h.bf16 %v93
    %v182 = vunpack.c.l.bf16 %v94
    %v183 = vunpack.c.h.bf16 %v94
    %v184 = vunpack.c.l.bf16 %v95
    %v185 = vunpack.c.h.bf16 %v95
    %v186 = vunpack.c.l.bf16 %v96
    %v187 = vunpack.c.h.bf16 %v96
    %v188 = vunpack.c.l.bf16 %v97
    %v189 = vunpack.c.h.bf16 %v97
    %v190 = vunpack.c.l.bf16 %v98
    %v191 = vunpack.c.h.bf16 %v98
    %v192 = vunpack.c.l.bf16 %v99
    %v193 = vunpack.c.h.bf16 %v99
    %v194 = vunpack.c.l.bf16 %v100
    %v195 = vunpack.c.h.bf16 %v100
    %v196 = vunpack.c.l.bf16 %v101
    %v197 = vunpack.c.h.bf16 %v101
    %v198 = vunpack.c.l.bf16 %v102
    %v199 = vunpack.c.h.bf16 %v102
    %v200 = vunpack.c.l.bf16 %v103
    %v201 = vunpack.c.h.bf16 %v103
    %v202 = vunpack.c.l.bf16 %v104
    %v203 = vunpack.c.h.bf16 %v104
    %v204 = vunpack.c.l.bf16 %v105
    %v205 = vunpack.c.h.bf16 %v105
    %v206 = vunpack.c.l.bf16 %v106
    %v207 = vunpack.c.h.bf16 %v106
    %v208 = vunpack.c.l.bf16 %v107
    %v209 = vunpack.c.h.bf16 %v107
    %v210 = vunpack.c.l.bf16 %v108
    %v211 = vunpack.c.h.bf16 %v108
    %v212 = vunpack.c.l.bf16 %v109
    %v213 = vunpack.c.h.bf16 %v109
    %v214 = vunpack.c.l.bf16 %v110
    %v215 = vunpack.c.h.bf16 %v110
    %v216 = vunpack.c.l.bf16 %v111
    %v217 = vunpack.c.h.bf16 %v111
    %v218 = vunpack.c.l.bf16 %v112
    %v219 = vunpack.c.h.bf16 %v112
    %v220 = vunpack.c.l.bf16 %v113
    %v221 = vunpack.c.h.bf16 %v113
    %v222 = vunpack.c.l.bf16 %v114
    %v223 = vunpack.c.h.bf16 %v114
    %v224 = vunpack.c.l.bf16 %v115
    %v225 = vunpack.c.h.bf16 %v115
    %v226 = vunpack.c.l.bf16 %v116
    %v227 = vunpack.c.h.bf16 %v116
    %v228 = vunpack.c.l.bf16 %v117
    %v229 = vunpack.c.h.bf16 %v117
    %v230 = vunpack.c.l.bf16 %v118
    %v231 = vunpack.c.h.bf16 %v118
    %v232 = vunpack.c.l.bf16 %v119
    %v233 = vunpack.c.h.bf16 %v119
    %v234 = vunpack.c.l.bf16 %v120
    %v235 = vunpack.c.h.bf16 %v120
    %v236 = vunpack.c.l.bf16 %v121
    %v237 = vunpack.c.h.bf16 %v121
    %v238 = vunpack.c.l.bf16 %v122
    %v239 = vunpack.c.h.bf16 %v122
    %v240 = vunpack.c.l.bf16 %v123
    %v241 = vunpack.c.h.bf16 %v123
    %v242 = vunpack.c.l.bf16 %v124
    %v243 = vunpack.c.h.bf16 %v124
    %v244 = vunpack.c.l.bf16 %v125
    %v245 = vunpack.c.h.bf16 %v125
    %v246 = vunpack.c.l.bf16 %v126
    %v247 = vunpack.c.h.bf16 %v126
    %v248 = vunpack.c.l.bf16 %v127
    %v249 = vunpack.c.h.bf16 %v127
    %v250 = vunpack.c.l.bf16 %v128
    %v251 = vunpack.c.h.bf16 %v128
    %v252 = vunpack.c.l.bf16 %v129
    %v253 = vunpack.c.h.bf16 %v129
    %v254 = vunpack.c.l.bf16 %v130
    %v255 = vunpack.c.h.bf16 %v130
    %v256 = vunpack.c.l.bf16 %v131
    %v257 = vunpack.c.h.bf16 %v131
    %v258 = vunpack.c.l.bf16 %v132
    %v259 = vunpack.c.h.bf16 %v132
    %v260 = vunpack.c.l.bf16 %v133
    %v261 = vunpack.c.h.bf16 %v133
    %v262 = vld [vmem:[#allocation5] sm:$0xf]
    %v264 = vlaneseq
    %v265 = vshrl.u32 %v264, 7
    %v266 = vsub.s32 0, %v265
    %v267 = vrot.slane %v262, %v266
    %v268 = vlaneseq
    %v269 = vshrl.u32 %v268, 7
    %v270 = vsub.s32 1, %v269
    %v271 = vrot.slane %v262, %v270
    %v272 = vlaneseq
    %v273 = vshrl.u32 %v272, 7
    %v274 = vsub.s32 2, %v273
    %v275 = vrot.slane %v262, %v274
    %v276 = vlaneseq
    %v277 = vshrl.u32 %v276, 7
    %v278 = vsub.s32 3, %v277
    %v279 = vrot.slane %v262, %v278
    %v284 = vmul.f32 %v134, %v267
    %v285 = vmul.f32 %v135, %v271
    %v286 = vmul.f32 %v136, %v275
    %v287 = vmul.f32 %v137, %v279
    %v288 = vmul.f32 %v138, %v267
    %v289 = vmul.f32 %v139, %v271
    %v290 = vmul.f32 %v140, %v275
    %v291 = vmul.f32 %v141, %v279
    %v292 = vmul.f32 %v142, %v267
    %v293 = vmul.f32 %v143, %v271
    %v294 = vmul.f32 %v144, %v275
    %v295 = vmul.f32 %v145, %v279
    %v296 = vmul.f32 %v146, %v267
    %v297 = vmul.f32 %v147, %v271
    %v298 = vmul.f32 %v148, %v275
    %v299 = vmul.f32 %v149, %v279
    %v300 = vmul.f32 %v150, %v267
    %v301 = vmul.f32 %v151, %v271
    %v302 = vmul.f32 %v152, %v275
    %v303 = vmul.f32 %v153, %v279
    %v304 = vmul.f32 %v154, %v267
    %v305 = vmul.f32 %v155, %v271
    %v306 = vmul.f32 %v156, %v275
    %v307 = vmul.f32 %v157, %v279
    %v308 = vmul.f32 %v158, %v267
    %v309 = vmul.f32 %v159, %v271
    %v310 = vmul.f32 %v160, %v275
    %v311 = vmul.f32 %v161, %v279
    %v312 = vmul.f32 %v162, %v267
    %v313 = vmul.f32 %v163, %v271
    %v314 = vmul.f32 %v164, %v275
    %v315 = vmul.f32 %v165, %v279
    %v316 = vmul.f32 %v166, %v267
    %v317 = vmul.f32 %v167, %v271
    %v318 = vmul.f32 %v168, %v275
    %v319 = vmul.f32 %v169, %v279
    %v320 = vmul.f32 %v170, %v267
    %v321 = vmul.f32 %v171, %v271
    %v322 = vmul.f32 %v172, %v275
    %v323 = vmul.f32 %v173, %v279
    %v324 = vmul.f32 %v174, %v267
    %v325 = vmul.f32 %v175, %v271
    %v326 = vmul.f32 %v176, %v275
    %v327 = vmul.f32 %v177, %v279
    %v328 = vmul.f32 %v178, %v267
    %v329 = vmul.f32 %v179, %v271
    %v330 = vmul.f32 %v180, %v275
    %v331 = vmul.f32 %v181, %v279
    %v332 = vmul.f32 %v182, %v267
    %v333 = vmul.f32 %v183, %v271
    %v334 = vmul.f32 %v184, %v275
    %v335 = vmul.f32 %v185, %v279
    %v336 = vmul.f32 %v186, %v267
    %v337 = vmul.f32 %v187, %v271
    %v338 = vmul.f32 %v188, %v275
    %v339 = vmul.f32 %v189, %v279
    %v340 = vmul.f32 %v190, %v267
    %v341 = vmul.f32 %v191, %v271
    %v342 = vmul.f32 %v192, %v275
    %v343 = vmul.f32 %v193, %v279
    %v344 = vmul.f32 %v194, %v267
    %v345 = vmul.f32 %v195, %v271
    %v346 = vmul.f32 %v196, %v275
    %v347 = vmul.f32 %v197, %v279
    %v348 = vmul.f32 %v198, %v267
    %v349 = vmul.f32 %v199, %v271
    %v350 = vmul.f32 %v200, %v275
    %v351 = vmul.f32 %v201, %v279
    %v352 = vmul.f32 %v202, %v267
    %v353 = vmul.f32 %v203, %v271
    %v354 = vmul.f32 %v204, %v275
    %v355 = vmul.f32 %v205, %v279
    %v356 = vmul.f32 %v206, %v267
    %v357 = vmul.f32 %v207, %v271
    %v358 = vmul.f32 %v208, %v275
    %v359 = vmul.f32 %v209, %v279
    %v360 = vmul.f32 %v210, %v267
    %v361 = vmul.f32 %v211, %v271
    %v362 = vmul.f32 %v212, %v275
    %v363 = vmul.f32 %v213, %v279
    %v364 = vmul.f32 %v214, %v267
    %v365 = vmul.f32 %v215, %v271
    %v366 = vmul.f32 %v216, %v275
    %v367 = vmul.f32 %v217, %v279
    %v368 = vmul.f32 %v218, %v267
    %v369 = vmul.f32 %v219, %v271
    %v370 = vmul.f32 %v220, %v275
    %v371 = vmul.f32 %v221, %v279
    %v372 = vmul.f32 %v222, %v267
    %v373 = vmul.f32 %v223, %v271
    %v374 = vmul.f32 %v224, %v275
    %v375 = vmul.f32 %v225, %v279
    %v376 = vmul.f32 %v226, %v267
    %v377 = vmul.f32 %v227, %v271
    %v378 = vmul.f32 %v228, %v275
    %v379 = vmul.f32 %v229, %v279
    %v380 = vmul.f32 %v230, %v267
    %v381 = vmul.f32 %v231, %v271
    %v382 = vmul.f32 %v232, %v275
    %v383 = vmul.f32 %v233, %v279
    %v384 = vmul.f32 %v234, %v267
    %v385 = vmul.f32 %v235, %v271
    %v386 = vmul.f32 %v236, %v275
    %v387 = vmul.f32 %v237, %v279
    %v388 = vmul.f32 %v238, %v267
    %v389 = vmul.f32 %v239, %v271
    %v390 = vmul.f32 %v240, %v275
    %v391 = vmul.f32 %v241, %v279
    %v392 = vmul.f32 %v242, %v267
    %v393 = vmul.f32 %v243, %v271
    %v394 = vmul.f32 %v244, %v275
    %v395 = vmul.f32 %v245, %v279
    %v396 = vmul.f32 %v246, %v267
    %v397 = vmul.f32 %v247, %v271
    %v398 = vmul.f32 %v248, %v275
    %v399 = vmul.f32 %v249, %v279
    %v400 = vmul.f32 %v250, %v267
    %v401 = vmul.f32 %v251, %v271
    %v402 = vmul.f32 %v252, %v275
    %v403 = vmul.f32 %v253, %v279
    %v404 = vmul.f32 %v254, %v267
    %v405 = vmul.f32 %v255, %v271
    %v406 = vmul.f32 %v256, %v275
    %v407 = vmul.f32 %v257, %v279
    %v408 = vmul.f32 %v258, %v267
    %v409 = vmul.f32 %v259, %v271
    %v410 = vmul.f32 %v260, %v275
    %v411 = vmul.f32 %v261, %v279
    %v412 = vld [vmem:[#allocation7] sm:$0xf]
    %v414 = vlaneseq
    %v415 = vshrl.u32 %v414, 7
    %v416 = vsub.s32 0, %v415
    %v417 = vrot.slane %v412, %v416
    %v418 = vlaneseq
    %v419 = vshrl.u32 %v418, 7
    %v420 = vsub.s32 1, %v419
    %v421 = vrot.slane %v412, %v420
    %v422 = vlaneseq
    %v423 = vshrl.u32 %v422, 7
    %v424 = vsub.s32 2, %v423
    %v425 = vrot.slane %v412, %v424
    %v426 = vlaneseq
    %v427 = vshrl.u32 %v426, 7
    %v428 = vsub.s32 3, %v427
    %v429 = vrot.slane %v412, %v428
    %v434 = vadd.f32 %v284, %v417
    %v435 = vadd.f32 %v285, %v421
    %v436 = vadd.f32 %v286, %v425
    %v437 = vadd.f32 %v287, %v429
    %v438 = vadd.f32 %v288, %v417
    %v439 = vadd.f32 %v289, %v421
    %v440 = vadd.f32 %v290, %v425
    %v441 = vadd.f32 %v291, %v429
    %v442 = vadd.f32 %v292, %v417
    %v443 = vadd.f32 %v293, %v421
    %v444 = vadd.f32 %v294, %v425
    %v445 = vadd.f32 %v295, %v429
    %v446 = vadd.f32 %v296, %v417
    %v447 = vadd.f32 %v297, %v421
    %v448 = vadd.f32 %v298, %v425
    %v449 = vadd.f32 %v299, %v429
    %v450 = vadd.f32 %v300, %v417
    %v451 = vadd.f32 %v301, %v421
    %v452 = vadd.f32 %v302, %v425
    %v453 = vadd.f32 %v303, %v429
    %v454 = vadd.f32 %v304, %v417
    %v455 = vadd.f32 %v305, %v421
    %v456 = vadd.f32 %v306, %v425
    %v457 = vadd.f32 %v307, %v429
    %v458 = vadd.f32 %v308, %v417
    %v459 = vadd.f32 %v309, %v421
    %v460 = vadd.f32 %v310, %v425
    %v461 = vadd.f32 %v311, %v429
    %v462 = vadd.f32 %v312, %v417
    %v463 = vadd.f32 %v313, %v421
    %v464 = vadd.f32 %v314, %v425
    %v465 = vadd.f32 %v315, %v429
    %v466 = vadd.f32 %v316, %v417
    %v467 = vadd.f32 %v317, %v421
    %v468 = vadd.f32 %v318, %v425
    %v469 = vadd.f32 %v319, %v429
    %v470 = vadd.f32 %v320, %v417
    %v471 = vadd.f32 %v321, %v421
    %v472 = vadd.f32 %v322, %v425
    %v473 = vadd.f32 %v323, %v429
    %v474 = vadd.f32 %v324, %v417
    %v475 = vadd.f32 %v325, %v421
    %v476 = vadd.f32 %v326, %v425
    %v477 = vadd.f32 %v327, %v429
    %v478 = vadd.f32 %v328, %v417
    %v479 = vadd.f32 %v329, %v421
    %v480 = vadd.f32 %v330, %v425
    %v481 = vadd.f32 %v331, %v429
    %v482 = vadd.f32 %v332, %v417
    %v483 = vadd.f32 %v333, %v421
    %v484 = vadd.f32 %v334, %v425
    %v485 = vadd.f32 %v335, %v429
    %v486 = vadd.f32 %v336, %v417
    %v487 = vadd.f32 %v337, %v421
    %v488 = vadd.f32 %v338, %v425
    %v489 = vadd.f32 %v339, %v429
    %v490 = vadd.f32 %v340, %v417
    %v491 = vadd.f32 %v341, %v421
    %v492 = vadd.f32 %v342, %v425
    %v493 = vadd.f32 %v343, %v429
    %v494 = vadd.f32 %v344, %v417
    %v495 = vadd.f32 %v345, %v421
    %v496 = vadd.f32 %v346, %v425
    %v497 = vadd.f32 %v347, %v429
    %v498 = vadd.f32 %v348, %v417
    %v499 = vadd.f32 %v349, %v421
    %v500 = vadd.f32 %v350, %v425
    %v501 = vadd.f32 %v351, %v429
    %v502 = vadd.f32 %v352, %v417
    %v503 = vadd.f32 %v353, %v421
    %v504 = vadd.f32 %v354, %v425
    %v505 = vadd.f32 %v355, %v429
    %v506 = vadd.f32 %v356, %v417
    %v507 = vadd.f32 %v357, %v421
    %v508 = vadd.f32 %v358, %v425
    %v509 = vadd.f32 %v359, %v429
    %v510 = vadd.f32 %v360, %v417
    %v511 = vadd.f32 %v361, %v421
    %v512 = vadd.f32 %v362, %v425
    %v513 = vadd.f32 %v363, %v429
    %v514 = vadd.f32 %v364, %v417
    %v515 = vadd.f32 %v365, %v421
    %v516 = vadd.f32 %v366, %v425
    %v517 = vadd.f32 %v367, %v429
    %v518 = vadd.f32 %v368, %v417
    %v519 = vadd.f32 %v369, %v421
    %v520 = vadd.f32 %v370, %v425
    %v521 = vadd.f32 %v371, %v429
    %v522 = vadd.f32 %v372, %v417
    %v523 = vadd.f32 %v373, %v421
    %v524 = vadd.f32 %v374, %v425
    %v525 = vadd.f32 %v375, %v429
    %v526 = vadd.f32 %v376, %v417
    %v527 = vadd.f32 %v377, %v421
    %v528 = vadd.f32 %v378, %v425
    %v529 = vadd.f32 %v379, %v429
    %v530 = vadd.f32 %v380, %v417
    %v531 = vadd.f32 %v381, %v421
    %v532 = vadd.f32 %v382, %v425
    %v533 = vadd.f32 %v383, %v429
    %v534 = vadd.f32 %v384, %v417
    %v535 = vadd.f32 %v385, %v421
    %v536 = vadd.f32 %v386, %v425
    %v537 = vadd.f32 %v387, %v429
    %v538 = vadd.f32 %v388, %v417
    %v539 = vadd.f32 %v389, %v421
    %v540 = vadd.f32 %v390, %v425
    %v541 = vadd.f32 %v391, %v429
    %v542 = vadd.f32 %v392, %v417
    %v543 = vadd.f32 %v393, %v421
    %v544 = vadd.f32 %v394, %v425
    %v545 = vadd.f32 %v395, %v429
    %v546 = vadd.f32 %v396, %v417
    %v547 = vadd.f32 %v397, %v421
    %v548 = vadd.f32 %v398, %v425
    %v549 = vadd.f32 %v399, %v429
    %v550 = vadd.f32 %v400, %v417
    %v551 = vadd.f32 %v401, %v421
    %v552 = vadd.f32 %v402, %v425
    %v553 = vadd.f32 %v403, %v429
    %v554 = vadd.f32 %v404, %v417
    %v555 = vadd.f32 %v405, %v421
    %v556 = vadd.f32 %v406, %v425
    %v557 = vadd.f32 %v407, %v429
    %v558 = vadd.f32 %v408, %v417
    %v559 = vadd.f32 %v409, %v421
    %v560 = vadd.f32 %v410, %v425
    %v561 = vadd.f32 %v411, %v429
    %v562 = vmax.f32 %v434, 0.0
    %v563 = vmax.f32 %v435, 0.0
    %v564 = vmax.f32 %v436, 0.0
    %v565 = vmax.f32 %v437, 0.0
    %v566 = vmax.f32 %v438, 0.0
    %v567 = vmax.f32 %v439, 0.0
    %v568 = vmax.f32 %v440, 0.0
    %v569 = vmax.f32 %v441, 0.0
    %v570 = vmax.f32 %v442, 0.0
    %v571 = vmax.f32 %v443, 0.0
    %v572 = vmax.f32 %v444, 0.0
    %v573 = vmax.f32 %v445, 0.0
    %v574 = vmax.f32 %v446, 0.0
    %v575 = vmax.f32 %v447, 0.0
    %v576 = vmax.f32 %v448, 0.0
    %v577 = vmax.f32 %v449, 0.0
    %v578 = vmax.f32 %v450, 0.0
    %v579 = vmax.f32 %v451, 0.0
    %v580 = vmax.f32 %v452, 0.0
    %v581 = vmax.f32 %v453, 0.0
    %v582 = vmax.f32 %v454, 0.0
    %v583 = vmax.f32 %v455, 0.0
    %v584 = vmax.f32 %v456, 0.0
    %v585 = vmax.f32 %v457, 0.0
    %v586 = vmax.f32 %v458, 0.0
    %v587 = vmax.f32 %v459, 0.0
    %v588 = vmax.f32 %v460, 0.0
    %v589 = vmax.f32 %v461, 0.0
    %v590 = vmax.f32 %v462, 0.0
    %v591 = vmax.f32 %v463, 0.0
    %v592 = vmax.f32 %v464, 0.0
    %v593 = vmax.f32 %v465, 0.0
    %v594 = vmax.f32 %v466, 0.0
    %v595 = vmax.f32 %v467, 0.0
    %v596 = vmax.f32 %v468, 0.0
    %v597 = vmax.f32 %v469, 0.0
    %v598 = vmax.f32 %v470, 0.0
    %v599 = vmax.f32 %v471, 0.0
    %v600 = vmax.f32 %v472, 0.0
    %v601 = vmax.f32 %v473, 0.0
    %v602 = vmax.f32 %v474, 0.0
    %v603 = vmax.f32 %v475, 0.0
    %v604 = vmax.f32 %v476, 0.0
    %v605 = vmax.f32 %v477, 0.0
    %v606 = vmax.f32 %v478, 0.0
    %v607 = vmax.f32 %v479, 0.0
    %v608 = vmax.f32 %v480, 0.0
    %v609 = vmax.f32 %v481, 0.0
    %v610 = vmax.f32 %v482, 0.0
    %v611 = vmax.f32 %v483, 0.0
    %v612 = vmax.f32 %v484, 0.0
    %v613 = vmax.f32 %v485, 0.0
    %v614 = vmax.f32 %v486, 0.0
    %v615 = vmax.f32 %v487, 0.0
    %v616 = vmax.f32 %v488, 0.0
    %v617 = vmax.f32 %v489, 0.0
    %v618 = vmax.f32 %v490, 0.0
    %v619 = vmax.f32 %v491, 0.0
    %v620 = vmax.f32 %v492, 0.0
    %v621 = vmax.f32 %v493, 0.0
    %v622 = vmax.f32 %v494, 0.0
    %v623 = vmax.f32 %v495, 0.0
    %v624 = vmax.f32 %v496, 0.0
    %v625 = vmax.f32 %v497, 0.0
    %v626 = vmax.f32 %v498, 0.0
    %v627 = vmax.f32 %v499, 0.0
    %v628 = vmax.f32 %v500, 0.0
    %v629 = vmax.f32 %v501, 0.0
    %v630 = vmax.f32 %v502, 0.0
    %v631 = vmax.f32 %v503, 0.0
    %v632 = vmax.f32 %v504, 0.0
    %v633 = vmax.f32 %v505, 0.0
    %v634 = vmax.f32 %v506, 0.0
    %v635 = vmax.f32 %v507, 0.0
    %v636 = vmax.f32 %v508, 0.0
    %v637 = vmax.f32 %v509, 0.0
    %v638 = vmax.f32 %v510, 0.0
    %v639 = vmax.f32 %v511, 0.0
    %v640 = vmax.f32 %v512, 0.0
    %v641 = vmax.f32 %v513, 0.0
    %v642 = vmax.f32 %v514, 0.0
    %v643 = vmax.f32 %v515, 0.0
    %v644 = vmax.f32 %v516, 0.0
    %v645 = vmax.f32 %v517, 0.0
    %v646 = vmax.f32 %v518, 0.0
    %v647 = vmax.f32 %v519, 0.0
    %v648 = vmax.f32 %v520, 0.0
    %v649 = vmax.f32 %v521, 0.0
    %v650 = vmax.f32 %v522, 0.0
    %v651 = vmax.f32 %v523, 0.0
    %v652 = vmax.f32 %v524, 0.0
    %v653 = vmax.f32 %v525, 0.0
    %v654 = vmax.f32 %v526, 0.0
    %v655 = vmax.f32 %v527, 0.0
    %v656 = vmax.f32 %v528, 0.0
    %v657 = vmax.f32 %v529, 0.0
    %v658 = vmax.f32 %v530, 0.0
    %v659 = vmax.f32 %v531, 0.0
    %v660 = vmax.f32 %v532, 0.0
    %v661 = vmax.f32 %v533, 0.0
    %v662 = vmax.f32 %v534, 0.0
    %v663 = vmax.f32 %v535, 0.0
    %v664 = vmax.f32 %v536, 0.0
    %v665 = vmax.f32 %v537, 0.0
    %v666 = vmax.f32 %v538, 0.0
    %v667 = vmax.f32 %v539, 0.0
    %v668 = vmax.f32 %v540, 0.0
    %v669 = vmax.f32 %v541, 0.0
    %v670 = vmax.f32 %v542, 0.0
    %v671 = vmax.f32 %v543, 0.0
    %v672 = vmax.f32 %v544, 0.0
    %v673 = vmax.f32 %v545, 0.0
    %v674 = vmax.f32 %v546, 0.0
    %v675 = vmax.f32 %v547, 0.0
    %v676 = vmax.f32 %v548, 0.0
    %v677 = vmax.f32 %v549, 0.0
    %v678 = vmax.f32 %v550, 0.0
    %v679 = vmax.f32 %v551, 0.0
    %v680 = vmax.f32 %v552, 0.0
    %v681 = vmax.f32 %v553, 0.0
    %v682 = vmax.f32 %v554, 0.0
    %v683 = vmax.f32 %v555, 0.0
    %v684 = vmax.f32 %v556, 0.0
    %v685 = vmax.f32 %v557, 0.0
    %v686 = vmax.f32 %v558, 0.0
    %v687 = vmax.f32 %v559, 0.0
    %v688 = vmax.f32 %v560, 0.0
    %v689 = vmax.f32 %v561, 0.0
    %v690 = vadd.f32 %v562, %v564
    %v691 = vadd.f32 %v563, %v565
    %v692 = vadd.f32 %v566, %v568
    %v693 = vadd.f32 %v567, %v569
    %v694 = vadd.f32 %v570, %v572
    %v695 = vadd.f32 %v571, %v573
    %v696 = vadd.f32 %v574, %v576
    %v697 = vadd.f32 %v575, %v577
    %v698 = vadd.f32 %v578, %v580
    %v699 = vadd.f32 %v579, %v581
    %v700 = vadd.f32 %v582, %v584
    %v701 = vadd.f32 %v583, %v585
    %v702 = vadd.f32 %v586, %v588
    %v703 = vadd.f32 %v587, %v589
    %v704 = vadd.f32 %v590, %v592
    %v705 = vadd.f32 %v591, %v593
    %v706 = vadd.f32 %v594, %v596
    %v707 = vadd.f32 %v595, %v597
    %v708 = vadd.f32 %v598, %v600
    %v709 = vadd.f32 %v599, %v601
    %v710 = vadd.f32 %v602, %v604
    %v711 = vadd.f32 %v603, %v605
    %v712 = vadd.f32 %v606, %v608
    %v713 = vadd.f32 %v607, %v609
    %v714 = vadd.f32 %v610, %v612
    %v715 = vadd.f32 %v611, %v613
    %v716 = vadd.f32 %v614, %v616
    %v717 = vadd.f32 %v615, %v617
    %v718 = vadd.f32 %v618, %v620
    %v719 = vadd.f32 %v619, %v621
    %v720 = vadd.f32 %v622, %v624
    %v721 = vadd.f32 %v623, %v625
    %v722 = vadd.f32 %v626, %v628
    %v723 = vadd.f32 %v627, %v629
    %v724 = vadd.f32 %v630, %v632
    %v725 = vadd.f32 %v631, %v633
    %v726 = vadd.f32 %v634, %v636
    %v727 = vadd.f32 %v635, %v637
    %v728 = vadd.f32 %v638, %v640
    %v729 = vadd.f32 %v639, %v641
    %v730 = vadd.f32 %v642, %v644
    %v731 = vadd.f32 %v643, %v645
    %v732 = vadd.f32 %v646, %v648
    %v733 = vadd.f32 %v647, %v649
    %v734 = vadd.f32 %v650, %v652
    %v735 = vadd.f32 %v651, %v653
    %v736 = vadd.f32 %v654, %v656
    %v737 = vadd.f32 %v655, %v657
    %v738 = vadd.f32 %v658, %v660
    %v739 = vadd.f32 %v659, %v661
    %v740 = vadd.f32 %v662, %v664
    %v741 = vadd.f32 %v663, %v665
    %v742 = vadd.f32 %v666, %v668
    %v743 = vadd.f32 %v667, %v669
    %v744 = vadd.f32 %v670, %v672
    %v745 = vadd.f32 %v671, %v673
    %v746 = vadd.f32 %v674, %v676
    %v747 = vadd.f32 %v675, %v677
    %v748 = vadd.f32 %v678, %v680
    %v749 = vadd.f32 %v679, %v681
    %v750 = vadd.f32 %v682, %v684
    %v751 = vadd.f32 %v683, %v685
    %v752 = vadd.f32 %v686, %v688
    %v753 = vadd.f32 %v687, %v689
    %v754 = vadd.f32 %v690, %v692
    %v755 = vadd.f32 %v691, %v693
    %v756 = vadd.f32 %v694, %v696
    %v757 = vadd.f32 %v695, %v697
    %v758 = vadd.f32 %v698, %v700
    %v759 = vadd.f32 %v699, %v701
    %v760 = vadd.f32 %v702, %v704
    %v761 = vadd.f32 %v703, %v705
    %v762 = vadd.f32 %v706, %v708
    %v763 = vadd.f32 %v707, %v709
    %v764 = vadd.f32 %v710, %v712
    %v765 = vadd.f32 %v711, %v713
    %v766 = vadd.f32 %v714, %v716
    %v767 = vadd.f32 %v715, %v717
    %v768 = vadd.f32 %v718, %v720
    %v769 = vadd.f32 %v719, %v721
    %v770 = vadd.f32 %v722, %v724
    %v771 = vadd.f32 %v723, %v725
    %v772 = vadd.f32 %v726, %v728
    %v773 = vadd.f32 %v727, %v729
    %v774 = vadd.f32 %v730, %v732
    %v775 = vadd.f32 %v731, %v733
    %v776 = vadd.f32 %v734, %v736
    %v777 = vadd.f32 %v735, %v737
    %v778 = vadd.f32 %v738, %v740
    %v779 = vadd.f32 %v739, %v741
    %v780 = vadd.f32 %v742, %v744
    %v781 = vadd.f32 %v743, %v745
    %v782 = vadd.f32 %v746, %v748
    %v783 = vadd.f32 %v747, %v749
    %v784 = vadd.f32 %v750, %v752
    %v785 = vadd.f32 %v751, %v753
    %v786 = vmul.f32 %v754, 0.25
    %v787 = vmul.f32 %v755, 0.25
    %v788 = vmul.f32 %v756, 0.25
    %v789 = vmul.f32 %v757, 0.25
    %v790 = vmul.f32 %v758, 0.25
    %v791 = vmul.f32 %v759, 0.25
    %v792 = vmul.f32 %v760, 0.25
    %v793 = vmul.f32 %v761, 0.25
    %v794 = vmul.f32 %v762, 0.25
    %v795 = vmul.f32 %v763, 0.25
    %v796 = vmul.f32 %v764, 0.25
    %v797 = vmul.f32 %v765, 0.25
    %v798 = vmul.f32 %v766, 0.25
    %v799 = vmul.f32 %v767, 0.25
    %v800 = vmul.f32 %v768, 0.25
    %v801 = vmul.f32 %v769, 0.25
    %v802 = vmul.f32 %v770, 0.25
    %v803 = vmul.f32 %v771, 0.25
    %v804 = vmul.f32 %v772, 0.25
    %v805 = vmul.f32 %v773, 0.25
    %v806 = vmul.f32 %v774, 0.25
    %v807 = vmul.f32 %v775, 0.25
    %v808 = vmul.f32 %v776, 0.25
    %v809 = vmul.f32 %v777, 0.25
    %v810 = vmul.f32 %v778, 0.25
    %v811 = vmul.f32 %v779, 0.25
    %v812 = vmul.f32 %v780, 0.25
    %v813 = vmul.f32 %v781, 0.25
    %v814 = vmul.f32 %v782, 0.25
    %v815 = vmul.f32 %v783, 0.25
    %v816 = vmul.f32 %v784, 0.25
    %v817 = vmul.f32 %v785, 0.25
    %v818 = vpack.c.bf16 %v788, %v786
    %v819 = vpack.c.bf16 %v789, %v787
    %v820 = vpack.c.bf16 %v792, %v790
    %v821 = vpack.c.bf16 %v793, %v791
    %v822 = vpack.c.bf16 %v796, %v794
    %v823 = vpack.c.bf16 %v797, %v795
    %v824 = vpack.c.bf16 %v800, %v798
    %v825 = vpack.c.bf16 %v801, %v799
    %v826 = vpack.c.bf16 %v804, %v802
    %v827 = vpack.c.bf16 %v805, %v803
    %v828 = vpack.c.bf16 %v808, %v806
    %v829 = vpack.c.bf16 %v809, %v807
    %v830 = vpack.c.bf16 %v812, %v810
    %v831 = vpack.c.bf16 %v813, %v811
    %v832 = vpack.c.bf16 %v816, %v814
    %v833 = vpack.c.bf16 %v817, %v815
    %v834 = vld [vmem:[#allocation8] sm:$0xf]
    %v835 = vld [vmem:[#allocation8 + $0x4] sm:$0xf]
    %v836 = vld [vmem:[#allocation8 + $0x8] sm:$0xf]
    %v837 = vld [vmem:[#allocation8 + $0xc] sm:$0xf]
    %v838 = vld [vmem:[#allocation8 + $0x10] sm:$0xf]
    %v839 = vld [vmem:[#allocation8 + $0x14] sm:$0xf]
    %v840 = vld [vmem:[#allocation8 + $0x18] sm:$0xf]
    %v841 = vld [vmem:[#allocation8 + $0x1c] sm:$0xf]
    %v842 = vld [vmem:[#allocation8 + $0x20] sm:$0xf]
    %v843 = vld [vmem:[#allocation8 + $0x24] sm:$0xf]
    %v844 = vld [vmem:[#allocation8 + $0x28] sm:$0xf]
    %v845 = vld [vmem:[#allocation8 + $0x2c] sm:$0xf]
    %v846 = vld [vmem:[#allocation8 + $0x30] sm:$0xf]
    %v847 = vld [vmem:[#allocation8 + $0x34] sm:$0xf]
    %v848 = vld [vmem:[#allocation8 + $0x38] sm:$0xf]
    %v849 = vld [vmem:[#allocation8 + $0x3c] sm:$0xf]
    %v850 = vld [vmem:[#allocation8 + $0x40] sm:$0xf]
    %v851 = vld [vmem:[#allocation8 + $0x44] sm:$0xf]
    %v852 = vld [vmem:[#allocation8 + $0x48] sm:$0xf]
    %v853 = vld [vmem:[#allocation8 + $0x4c] sm:$0xf]
    %v854 = vld [vmem:[#allocation8 + $0x50] sm:$0xf]
    %v855 = vld [vmem:[#allocation8 + $0x54] sm:$0xf]
    %v856 = vld [vmem:[#allocation8 + $0x58] sm:$0xf]
    %v857 = vld [vmem:[#allocation8 + $0x5c] sm:$0xf]
    %v858 = vld [vmem:[#allocation8 + $0x60] sm:$0xf]
    %v859 = vld [vmem:[#allocation8 + $0x64] sm:$0xf]
    %v860 = vld [vmem:[#allocation8 + $0x68] sm:$0xf]
    %v861 = vld [vmem:[#allocation8 + $0x6c] sm:$0xf]
    %v862 = vld [vmem:[#allocation8 + $0x70] sm:$0xf]
    %v863 = vld [vmem:[#allocation8 + $0x74] sm:$0xf]
    %v864 = vld [vmem:[#allocation8 + $0x78] sm:$0xf]
    %v865 = vld [vmem:[#allocation8 + $0x7c] sm:$0xf]
    %v898 = vunpack.c.l.b16 %v834
    %v899 = vunpack.c.l.b16 %v835
    %v900 = vunpack.c.l.b16 %v836
    %v901 = vunpack.c.l.b16 %v837
    %v902 = vunpack.c.l.b16 %v838
    %v903 = vunpack.c.l.b16 %v839
    %v904 = vunpack.c.l.b16 %v840
    %v905 = vunpack.c.l.b16 %v841
    %v906 = vunpack.c.l.b16 %v842
    %v907 = vunpack.c.l.b16 %v843
    %v908 = vunpack.c.l.b16 %v844
    %v909 = vunpack.c.l.b16 %v845
    %v910 = vunpack.c.l.b16 %v846
    %v911 = vunpack.c.l.b16 %v847
    %v912 = vunpack.c.l.b16 %v848
    %v913 = vunpack.c.l.b16 %v849
    %v914 = vunpack.c.l.b16 %v850
    %v915 = vunpack.c.l.b16 %v851
    %v916 = vunpack.c.l.b16 %v852
    %v917 = vunpack.c.l.b16 %v853
    %v918 = vunpack.c.l.b16 %v854
    %v919 = vunpack.c.l.b16 %v855
    %v920 = vunpack.c.l.b16 %v856
    %v921 = vunpack.c.l.b16 %v857
    %v922 = vunpack.c.l.b16 %v858
    %v923 = vunpack.c.l.b16 %v859
    %v924 = vunpack.c.l.b16 %v860
    %v925 = vunpack.c.l.b16 %v861
    %v926 = vunpack.c.l.b16 %v862
    %v927 = vunpack.c.l.b16 %v863
    %v928 = vunpack.c.l.b16 %v864
    %v929 = vunpack.c.l.b16 %v865
    %v930 = vpack.c.b16 %v899, %v898
    %v931 = vpack.c.b16 %v901, %v900
    %v932 = vpack.c.b16 %v903, %v902
    %v933 = vpack.c.b16 %v905, %v904
    %v934 = vpack.c.b16 %v907, %v906
    %v935 = vpack.c.b16 %v909, %v908
    %v936 = vpack.c.b16 %v911, %v910
    %v937 = vpack.c.b16 %v913, %v912
    %v938 = vpack.c.b16 %v915, %v914
    %v939 = vpack.c.b16 %v917, %v916
    %v940 = vpack.c.b16 %v919, %v918
    %v941 = vpack.c.b16 %v921, %v920
    %v942 = vpack.c.b16 %v923, %v922
    %v943 = vpack.c.b16 %v925, %v924
    %v944 = vpack.c.b16 %v927, %v926
    %v945 = vpack.c.b16 %v929, %v928
    %962 = vmatprep.subr.bf16.mxu0 0
    %963 = vmatpush1.bf16.msra.mxu0 %v930
    %964 = vmatprep.subr.bf16.mxu0 0
    %965 = vmatpush1.bf16.msra.mxu0 %v931
    %966 = vmatprep.subr.bf16.mxu0 0
    %967 = vmatpush1.bf16.msra.mxu0 %v932
    %968 = vmatprep.subr.bf16.mxu0 0
    %969 = vmatpush1.bf16.msra.mxu0 %v933
    %970 = vmatprep.subr.bf16.mxu0 0
    %971 = vmatpush1.bf16.msra.mxu0 %v934
    %972 = vmatprep.subr.bf16.mxu0 0
    %973 = vmatpush1.bf16.msra.mxu0 %v935
    %974 = vmatprep.subr.bf16.mxu0 0
    %975 = vmatpush1.bf16.msra.mxu0 %v936
    %976 = vmatprep.subr.bf16.mxu0 0
    %977 = vmatpush1.bf16.msra.mxu0 %v937
    %978 = vmatprep.subr.bf16.mxu0 0
    %979 = vmatpush1.bf16.msra.mxu0 %v938
    %980 = vmatprep.subr.bf16.mxu0 0
    %981 = vmatpush1.bf16.msra.mxu0 %v939
    %982 = vmatprep.subr.bf16.mxu0 0
    %983 = vmatpush1.bf16.msra.mxu0 %v940
    %984 = vmatprep.subr.bf16.mxu0 0
    %985 = vmatpush1.bf16.msra.mxu0 %v941
    %986 = vmatprep.subr.bf16.mxu0 0
    %987 = vmatpush1.bf16.msra.mxu0 %v942
    %988 = vmatprep.subr.bf16.mxu0 0
    %989 = vmatpush1.bf16.msra.mxu0 %v943
    %990 = vmatprep.subr.bf16.mxu0 0
    %991 = vmatpush1.bf16.msra.mxu0 %v944
    %992 = vmatprep.subr.bf16.mxu0 0
    %993 = vmatpush1.bf16.msra.mxu0 %v945
    %994 = vmatprep.mubr.bf16.mxu0 %v819
    %995 = vmatmul.mubr.bf16.gmra.mrb[0].mxu0 %v818
    %v996 = vpop.f32.mrb[0].mxu0
    %v997 = vadd.f32 0.0, %v996
    %v998 = vpop.f32.mrb[0].mxu0
    %v999 = vpop.f32.mrb[0].mxu0
    %v1000 = vadd.f32 0.0, %v999
    %v1001 = vpop.f32.mrb[0].mxu0
    %1002 = vmatprep.mubr.bf16.mxu0 %v821
    %1003 = vmatmul.mubr.bf16.gmra.mrb[0].mxu0 %v820
    %v1004 = vpop.f32.mrb[0].mxu0
    %v1005 = vadd.f32 0.0, %v1004
    %v1006 = vpop.f32.mrb[0].mxu0
    %v1007 = vpop.f32.mrb[0].mxu0
    %v1008 = vadd.f32 0.0, %v1007
    %v1009 = vpop.f32.mrb[0].mxu0
    %1010 = vmatprep.mubr.bf16.mxu0 %v823
    %1011 = vmatmul.mubr.bf16.gmra.mrb[0].mxu0 %v822
    %v1012 = vpop.f32.mrb[0].mxu0
    %v1013 = vadd.f32 0.0, %v1012
    %v1014 = vpop.f32.mrb[0].mxu0
    %v1015 = vpop.f32.mrb[0].mxu0
    %v1016 = vadd.f32 0.0, %v1015
    %v1017 = vpop.f32.mrb[0].mxu0
    %1018 = vmatprep.mubr.bf16.mxu0 %v825
    %1019 = vmatmul.mubr.bf16.gmra.mrb[0].mxu0 %v824
    %v1020 = vpop.f32.mrb[0].mxu0
    %v1021 = vadd.f32 0.0, %v1020
    %v1022 = vpop.f32.mrb[0].mxu0
    %v1023 = vpop.f32.mrb[0].mxu0
    %v1024 = vadd.f32 0.0, %v1023
    %v1025 = vpop.f32.mrb[0].mxu0
    %1026 = vmatprep.mubr.bf16.mxu0 %v827
    %1027 = vmatmul.mubr.bf16.gmra.mrb[0].mxu0 %v826
    %v1028 = vpop.f32.mrb[0].mxu0
    %v1029 = vadd.f32 0.0, %v1028
    %v1030 = vpop.f32.mrb[0].mxu0
    %v1031 = vpop.f32.mrb[0].mxu0
    %v1032 = vadd.f32 0.0, %v1031
    %v1033 = vpop.f32.mrb[0].mxu0
    %1034 = vmatprep.mubr.bf16.mxu0 %v829
    %1035 = vmatmul.mubr.bf16.gmra.mrb[0].mxu0 %v828
    %v1036 = vpop.f32.mrb[0].mxu0
    %v1037 = vadd.f32 0.0, %v1036
    %v1038 = vpop.f32.mrb[0].mxu0
    %v1039 = vpop.f32.mrb[0].mxu0
    %v1040 = vadd.f32 0.0, %v1039
    %v1041 = vpop.f32.mrb[0].mxu0
    %1042 = vmatprep.mubr.bf16.mxu0 %v831
    %1043 = vmatmul.mubr.bf16.gmra.mrb[0].mxu0 %v830
    %v1044 = vpop.f32.mrb[0].mxu0
    %v1045 = vadd.f32 0.0, %v1044
    %v1046 = vpop.f32.mrb[0].mxu0
    %v1047 = vpop.f32.mrb[0].mxu0
    %v1048 = vadd.f32 0.0, %v1047
    %v1049 = vpop.f32.mrb[0].mxu0
    %1050 = vmatprep.mubr.bf16.mxu0 %v833
    %1051 = vmatmul.mubr.bf16.gmra.mrb[0].mxu0 %v832
    %v1052 = vpop.f32.mrb[0].mxu0
    %v1053 = vadd.f32 0.0, %v1052
    %v1054 = vpop.f32.mrb[0].mxu0
    %v1055 = vpop.f32.mrb[0].mxu0
    %v1056 = vadd.f32 0.0, %v1055
    %v1057 = vpop.f32.mrb[0].mxu0
    %1058 = vdwg.mxu0
    %1059 = vst [vmem:[#allocation10] sm:$0xff] %v997
    %1060 = vst [vmem:[#allocation10 + $0x8] sm:$0xff] %v1000
    %1061 = vst [vmem:[#allocation10 + $0x10] sm:$0xff] %v1005
    %1062 = vst [vmem:[#allocation10 + $0x18] sm:$0xff] %v1008
    %1063 = vst [vmem:[#allocation10 + $0x20] sm:$0xff] %v1013
    %1064 = vst [vmem:[#allocation10 + $0x28] sm:$0xff] %v1016
    %1065 = vst [vmem:[#allocation10 + $0x30] sm:$0xff] %v1021
    %1066 = vst [vmem:[#allocation10 + $0x38] sm:$0xff] %v1024
    %1067 = vst [vmem:[#allocation10 + $0x40] sm:$0xff] %v1029
    %1068 = vst [vmem:[#allocation10 + $0x48] sm:$0xff] %v1032
    %1069 = vst [vmem:[#allocation10 + $0x50] sm:$0xff] %v1037
    %1070 = vst [vmem:[#allocation10 + $0x58] sm:$0xff] %v1040
    %1071 = vst [vmem:[#allocation10 + $0x60] sm:$0xff] %v1045
    %1072 = vst [vmem:[#allocation10 + $0x68] sm:$0xff] %v1048
    %1073 = vst [vmem:[#allocation10 + $0x70] sm:$0xff] %v1053
    %1074 = vst [vmem:[#allocation10 + $0x78] sm:$0xff] %v1056
    // Predicated region
    $region34: #{transition_forward.1} parent=1 // pred_check
      _
    $region35: #{transition_forward.1} parent=1 // pred_check_branch
      %1076 = sbr.rel (0) target = $region37
    $region36: #{transition_forward.1} parent=1 // pred_region
      %s1078 = ssub.s32 2048, 2048
      %1079 = vsyncadd [#allocation4], %s1078
      %s1080 = sshll.u32 [#allocation10], 4
      %s1081 = int_to_ptr.vmem [resolvable:$true] %s1080
      %1086 = dma.vmem_to_hbm [thread:$0]  %s1081, 2048, %s4, [#allocation4], 128, 128, 8
    $region37: #{transition_forward.1} parent=1 // pred_fallthru
      _
    // Predicated region
    $region38: #{transition_forward.1} parent=1 // pred_check
      _
    $region39: #{transition_forward.1} parent=1 // pred_check_branch
      %1088 = sbr.rel (0) target = $region41
    $region40: #{transition_forward.1} parent=1 // pred_region
      %1089 = dma.done [#allocation4], 2048
    $region41: #{transition_forward.1} parent=1 // pred_fallthru
      _
    %1090 = vsyncpa [#allocation3], 1
    %1091 = vsyncpa [#allocation6], 1
    %1092 = vsyncpa [#allocation9], 1
    %1093 = vsyncpa [#allocation4], 1

</llo_original>
